<compile_context>
chip_gen: v6e
topology: v6e:2x2x1
jax: 0.10.0
libtpu: 0.0.40
codegen_flags: <defaults>
</compile_context>

<pallas_src>
import functools

import jax
import jax.numpy as jnp
import numpy as np
from jax.experimental import pallas as pl
from jax.experimental.pallas import tpu as pltpu


def _round_up(n, m):
    return ((n + m - 1) // m) * m


def _vmem_budget_bytes():
    """~80% of this chip's physical VMEM (headroom for compiler scratch)."""
    try:
        cap = int(pltpu.get_tpu_info().vmem_capacity_bytes)
    except Exception:
        cap = 64 * 1024 * 1024
    return int(cap * 0.8)


_VMEM_BUDGET = _vmem_budget_bytes()


# -----------------------------------------------------------------------------
# Kernels
# -----------------------------------------------------------------------------
def _ffnn_kernel_full(x_ref, w1_ref, b1_ref, w2_ref, b2_ref, o_ref):
    """Full-weight-resident: out = relu(x @ W1 + b1) @ W2 + b2 per batch tile."""
    h = jnp.dot(x_ref[...], w1_ref[...],
                preferred_element_type=jnp.float32) + b1_ref[...]
    h = jnp.maximum(h, 0.0).astype(w2_ref.dtype)
    o_ref[...] = (jnp.dot(h, w2_ref[...],
                          preferred_element_type=jnp.float32)
                  + b2_ref[...]).astype(o_ref.dtype)


def _ffnn_kernel_htiled(x_ref, w1_ref, b1_ref, w2_ref, b2_ref, o_ref, acc_ref):
    """Hidden-dim tiled variant (for VMEM-constrained configs, e.g. v7x):
    grid = (batch tiles, hidden tiles); f32 accumulator over the hidden axis.
    relu(x@W1[:,k] + b1[k]) only depends on hidden slice k, so fusion holds."""
    k = pl.program_id(1)

    @pl.when(k == 0)
    def _():
        acc_ref[...] = jnp.zeros_like(acc_ref)

    h = jnp.dot(x_ref[...], w1_ref[...],
                preferred_element_type=jnp.float32) + b1_ref[...]
    h = jnp.maximum(h, 0.0).astype(w2_ref.dtype)
    acc_ref[...] += jnp.dot(h, w2_ref[...],
                            preferred_element_type=jnp.float32)

    @pl.when(k == pl.num_programs(1) - 1)
    def _():
        o_ref[...] = (acc_ref[...] + b2_ref[...]).astype(o_ref.dtype)


# -----------------------------------------------------------------------------
# Tiling plan: pick the batch tile (and, if needed, a hidden tile) against the
# VMEM budget. All sizes are static Python ints at trace time.
# -----------------------------------------------------------------------------
def _plan(B, Dp, Hp, Cp, w_bytes, x_bytes, budget, force_hidden_tiling):
    b_aligned = _round_up(B, 8)
    tb_candidates = (512, 384, 256, 128, 64, 32, 16, 8)

    if not force_hidden_tiling:
        for tb in tb_candidates:
            tb = min(tb, b_aligned)
            need = ((Dp * Hp + Hp * Cp) * w_bytes      # weights (single-buffered)
                    + (Hp + Cp) * 4                    # biases
                    + 2 * tb * Dp * x_bytes            # x tile (double-buffered)
                    + 2 * tb * Cp * 4                  # out tile (double-buffered)
                    + tb * Hp * 4)                     # hidden activation (f32)
            if need <= budget:
                return "full", tb, None

    for th in (1024, 512, 256, 128):
        if th > Hp or Hp % th:
            continue
        for tb in tb_candidates:
            tb = min(tb, b_aligned)
            need = (2 * (Dp * th + th * Cp) * w_bytes  # weight slabs (double-buffered)
                    + 2 * th * 4 + Cp * 4              # bias slabs
                    + 2 * tb * Dp * x_bytes            # x tile
                    + 2 * tb * Cp * 4                  # out tile
                    + tb * Cp * 4                      # accumulator scratch
                    + tb * th * 4)                     # hidden slab (f32)
            if need <= budget:
                return "hidden", tb, th
    return "hidden", 8, 128  # last resort


# -----------------------------------------------------------------------------
# One-time parameter preparation: pad to lane-dense (multiples of 128) shapes
# and cast the MXU operands to the compute dtype. Kept OUT of the hot path.
# -----------------------------------------------------------------------------
def prepare_params(params, compute_dtype=jnp.float32):
    w1_t, b1 = params["w1_t"], params["b1"]
    w2_t, b2 = params["w2_t"], params["b2"]
    D, H = w1_t.shape
    C = w2_t.shape[1]
    Dp, Hp, Cp = _round_up(D, 128), _round_up(H, 128), _round_up(C, 128)
    # Zero padding contributes exactly 0 through both matmuls and the ReLU.
    w1_p = jnp.pad(w1_t, ((0, Dp - D), (0, Hp - H))).astype(compute_dtype)
    w2_p = jnp.pad(w2_t, ((0, Hp - H), (0, Cp - C))).astype(compute_dtype)
    b1_p = jnp.pad(b1, (0, Hp - H)).astype(jnp.float32).reshape(1, Hp)
    b2_p = jnp.pad(b2, (0, Cp - C)).astype(jnp.float32).reshape(1, Cp)
    return {"w1": w1_p, "b1": b1_p, "w2": w2_p, "b2": b2_p}


# -----------------------------------------------------------------------------
# Forward
# -----------------------------------------------------------------------------
@functools.partial(
    jax.jit,
    static_argnames=("out_features", "force_hidden_tiling", "weight_buffer_count"))
def ffnn_forward(x, padded, *, out_features, force_hidden_tiling=False,
                 weight_buffer_count=1):
    w1, b1, w2, b2 = padded["w1"], padded["b1"], padded["w2"], padded["b2"]
    B, D = x.shape
    Dp, Hp = w1.shape
    Cp = w2.shape[1]
    C = out_features

    w_bytes = jnp.dtype(w1.dtype).itemsize
    x_bytes = w_bytes  # x is cast to the compute dtype below

    path, tb, th = _plan(B, Dp, Hp, Cp, w_bytes, x_bytes,
                         _VMEM_BUDGET, force_hidden_tiling)

    Bp = _round_up(B, tb)
    x_p = jnp.pad(x.astype(w1.dtype), ((0, Bp - B), (0, Dp - D)))

    def wspec(shape, index_map):
        # Grid-invariant operands: single-buffer to halve their VMEM footprint.
        if weight_buffer_count == 2:
            return pl.BlockSpec(shape, index_map)
        return pl.BlockSpec(shape, index_map,
                            pipeline_mode=pl.Buffered(weight_buffer_count))

    cparams = pltpu.CompilerParams(
        dimension_semantics=(("parallel",) if path == "full"
                             else ("parallel", "arbitrary")),
        vmem_limit_bytes=_VMEM_BUDGET,
    )

    if path == "full":
        out_p = pl.pallas_call(
            _ffnn_kernel_full,
            out_shape=jax.ShapeDtypeStruct((Bp, Cp), jnp.float32),
            grid_spec=pltpu.PrefetchScalarGridSpec(
                num_scalar_prefetch=0,
                grid=(Bp // tb,),
                in_specs=[
                    pl.BlockSpec((tb, Dp), lambda i: (i, 0)),   # x tile
                    wspec((Dp, Hp), lambda i: (0, 0)),          # W1 (invariant)
                    wspec((1, Hp), lambda i: (0, 0)),           # b1
                    wspec((Hp, Cp), lambda i: (0, 0)),          # W2 (invariant)
                    wspec((1, Cp), lambda i: (0, 0)),           # b2
                ],
                out_specs=pl.BlockSpec((tb, Cp), lambda i: (i, 0)),
            ),
            compiler_params=cparams,
        )(x_p, w1, b1, w2, b2)
    else:
        out_p = pl.pallas_call(
            _ffnn_kernel_htiled,
            out_shape=jax.ShapeDtypeStruct((Bp, Cp), jnp.float32),
            grid_spec=pltpu.PrefetchScalarGridSpec(
                num_scalar_prefetch=0,
                grid=(Bp // tb, Hp // th),
                in_specs=[
                    pl.BlockSpec((tb, Dp), lambda i, k: (i, 0)),   # x tile
                    pl.BlockSpec((Dp, th), lambda i, k: (0, k)),   # W1 slab
                    pl.BlockSpec((1, th), lambda i, k: (0, k)),    # b1 slab
                    pl.BlockSpec((th, Cp), lambda i, k: (k, 0)),   # W2 slab
                    wspec((1, Cp), lambda i, k: (0, 0)),           # b2 (invariant)
                ],
                out_specs=pl.BlockSpec((tb, Cp), lambda i, k: (i, 0)),
                scratch_shapes=[pltpu.VMEM((tb, Cp), jnp.float32)],
            ),
            compiler_params=cparams,
        )(x_p, w1, b1, w2, b2)

    return out_p[:B, :C]


def ffnn_forward_safe(x, padded, out_features, **kw):
    """Prefer single-buffered invariant weights; fall back to the default
    double-buffered pipeline if this runtime rejects pl.Buffered(1)."""
    try:
        return ffnn_forward(x, padded, out_features=out_features,
                            weight_buffer_count=1, **kw)
    except Exception:
        return ffnn_forward(x, padded, out_features=out_features,
                            weight_buffer_count=2, **kw)


def ffnn_forward_auto(x, params, padded, out_features, **kw):
    """Tiny problems (everything far below one MXU tile) are pure launch/pad
    overhead for the kernel -> let XLA handle them; otherwise run Pallas."""
    B, D = x.shape
    H = params["w1_t"].shape[1]
    if max(B, D, H, out_features) < 128:
        return reference_forward(x, params)
    return ffnn_forward_safe(x, padded, out_features, **kw)


# -----------------------------------------------------------------------------
# Deterministic parameter init (shapes & init range follow nn.Linear).
# -----------------------------------------------------------------------------
def init_params(key, input_size, hidden_size, num_classes):
    k1 = 1.0 / np.sqrt(input_size)
    k2 = 1.0 / np.sqrt(hidden_size)
    key, a, b, c, d = jax.random.split(key, 5)
    # PyTorch stores weight as (out, in); we keep the transpose (in, out).
    w1 = jax.random.uniform(a, (hidden_size, input_size), jnp.float32, -k1, k1)
    b1 = jax.random.uniform(b, (hidden_size,), jnp.float32, -k1, k1)
    w2 = jax.random.uniform(c, (num_classes, hidden_size), jnp.float32, -k2, k2)
    b2 = jax.random.uniform(d, (num_classes,), jnp.float32, -k2, k2)
    return {"w1_t": w1.T, "b1": b1, "w2_t": w2.T, "b2": b2}


# -----------------------------------------------------------------------------
# Pure-JAX reference (same math) for correctness checks.
# -----------------------------------------------------------------------------
def reference_forward(x, params):
    h = x @ params["w1_t"] + params["b1"]
    h = jnp.maximum(h, 0.0)
    return h @ params["w2_t"] + params["b2"]


if __name__ == "__main__":
    key = jax.random.PRNGKey(0)

    # --- Small shapes consistent with the module (exact f32 path) -----------
    batch, input_size, hidden_size, num_classes = 2, 16, 32, 10
    key, kx, kp = jax.random.split(key, 3)
    x = jax.random.normal(kx, (batch, input_size), jnp.float32)
    params = init_params(kp, input_size, hidden_size, num_classes)

    prepared_f32 = prepare_params(params, compute_dtype=jnp.float32)
    out = jax.block_until_ready(ffnn_forward_safe(x, prepared_f32, num_classes))
    ref = reference_forward(x, params)
    np.testing.assert_allclose(np.asarray(out), np.asarray(ref),
                               rtol=1e-5, atol=1e-5)
    assert out.shape == (batch, num_classes)

    # --- Larger shapes: bf16 MXU path and the hidden-tiled (v7x) fallback ---
    B2, D2, H2, C2 = 512, 256, 512, 128
    key, kx2, kp2 = jax.random.split(key, 3)
    x2 = jax.random.normal(kx2, (B2, D2), jnp.float32)
    params2 = init_params(kp2, D2, H2, C2)
    ref2 = reference_forward(x2, params2)

    prepared_bf16 = prepare_params(params2, compute_dtype=jnp.bfloat16)
    out2 = jax.block_until_ready(ffnn_forward_safe(x2, prepared_bf16, C2))
    np.testing.assert_allclose(np.asarray(out2), np.asarray(ref2),
                               rtol=3e-2, atol=3e-2)

    out3 = jax.block_until_ready(
        ffnn_forward_safe(x2, prepared_bf16, C2, force_hidden_tiling=True))
    np.testing.assert_allclose(np.asarray(out3), np.asarray(ref2),
                               rtol=3e-2, atol=3e-2)

    print("KERNEL_OK")
</pallas_src>

<mosaic_0001>
module attributes {stable_mosaic.version = 11 : i64} {
  func.func @_ffnn_kernel_full(%arg0: i32, %arg1: memref<8x128xf32, #tpu.memory_space<vmem>>, %arg2: memref<128x128xf32, #tpu.memory_space<vmem>>, %arg3: memref<1x128xf32, #tpu.memory_space<vmem>>, %arg4: memref<128x128xf32, #tpu.memory_space<vmem>>, %arg5: memref<1x128xf32, #tpu.memory_space<vmem>>, %arg6: memref<8x128xf32, #tpu.memory_space<vmem>>) attributes {dimension_semantics = [#tpu.dimension_semantics<parallel>], iteration_bounds = array<i64: 1>, scalar_prefetch = 0 : i64, scratch_operands = 0 : i64, tpu.core_type = #tpu.core_type<tc>, window_params = [{transform_indices = @transform_0, window_bounds = array<i64: 8, 128>}, {pipeline_mode = #tpu.pipeline_mode<synchronous>, transform_indices = @transform_1, window_bounds = array<i64: 128, 128>}, {pipeline_mode = #tpu.pipeline_mode<synchronous>, transform_indices = @transform_2, window_bounds = array<i64: 1, 128>}, {pipeline_mode = #tpu.pipeline_mode<synchronous>, transform_indices = @transform_3, window_bounds = array<i64: 128, 128>}, {pipeline_mode = #tpu.pipeline_mode<synchronous>, transform_indices = @transform_4, window_bounds = array<i64: 1, 128>}, {transform_indices = @transform_5, window_bounds = array<i64: 8, 128>}]} {
    %c0 = arith.constant 0 : index
    %c0_0 = arith.constant 0 : index
    %0 = vector.load %arg1[%c0, %c0_0] : memref<8x128xf32, #tpu.memory_space<vmem>>, vector<8x128xf32>
    %c0_1 = arith.constant 0 : index
    %c0_2 = arith.constant 0 : index
    %1 = vector.load %arg2[%c0_1, %c0_2] : memref<128x128xf32, #tpu.memory_space<vmem>>, vector<128x128xf32>
    %cst = arith.constant dense<0.000000e+00> : vector<8x128xf32>
    %2 = tpu.matmul %0, %1, %cst {dimension_numbers = #tpu.dot_dimension_numbers<[1], [0], [0], [1], [0, 0, 1, 1], [], []>} : vector<8x128xf32>, vector<128x128xf32>, vector<8x128xf32> -> vector<8x128xf32>
    %c0_3 = arith.constant 0 : index
    %c0_4 = arith.constant 0 : index
    %3 = vector.load %arg3[%c0_3, %c0_4] : memref<1x128xf32, #tpu.memory_space<vmem>>, vector<1x128xf32>
    %4 = vector.broadcast %3 : vector<1x128xf32> to vector<8x128xf32>
    %5 = arith.addf %2, %4 : vector<8x128xf32>
    %cst_5 = arith.constant 0.000000e+00 : f32
    %6 = vector.broadcast %cst_5 : f32 to vector<8x128xf32>
    %7 = arith.maximumf %5, %6 : vector<8x128xf32>
    %c0_6 = arith.constant 0 : index
    %c0_7 = arith.constant 0 : index
    %8 = vector.load %arg4[%c0_6, %c0_7] : memref<128x128xf32, #tpu.memory_space<vmem>>, vector<128x128xf32>
    %cst_8 = arith.constant dense<0.000000e+00> : vector<8x128xf32>
    %9 = tpu.matmul %7, %8, %cst_8 {dimension_numbers = #tpu.dot_dimension_numbers<[1], [0], [0], [1], [0, 0, 1, 1], [], []>} : vector<8x128xf32>, vector<128x128xf32>, vector<8x128xf32> -> vector<8x128xf32>
    %c0_9 = arith.constant 0 : index
    %c0_10 = arith.constant 0 : index
    %10 = vector.load %arg5[%c0_9, %c0_10] : memref<1x128xf32, #tpu.memory_space<vmem>>, vector<1x128xf32>
    %11 = vector.broadcast %10 : vector<1x128xf32> to vector<8x128xf32>
    %12 = arith.addf %9, %11 : vector<8x128xf32>
    %c0_11 = arith.constant 0 : index
    %c0_12 = arith.constant 0 : index
    %13 = vector.load %arg6[%c0_11, %c0_12] : memref<8x128xf32, #tpu.memory_space<vmem>>, vector<8x128xf32>
    tpu.vector_store %arg6[%c0_11, %c0_12], %12 {strides = array<i32>} : memref<8x128xf32, #tpu.memory_space<vmem>>, vector<8x128xf32>,
    return
  }
  func.func @transform_0(%arg0: i32) -> (i32, i32) {
    %c0_i32 = arith.constant 0 : i32
    %c0_i32_0 = arith.constant 0 : i32
    return %arg0, %c0_i32 : i32, i32
  }
  func.func @transform_1(%arg0: i32) -> (i32, i32) {
    %c0_i32 = arith.constant 0 : i32
    %c0_i32_0 = arith.constant 0 : i32
    %c0_i32_1 = arith.constant 0 : i32
    return %c0_i32, %c0_i32_0 : i32, i32
  }
  func.func @transform_2(%arg0: i32) -> (i32, i32) {
    %c0_i32 = arith.constant 0 : i32
    %c0_i32_0 = arith.constant 0 : i32
    %c0_i32_1 = arith.constant 0 : i32
    return %c0_i32, %c0_i32_0 : i32, i32
  }
  func.func @transform_3(%arg0: i32) -> (i32, i32) {
    %c0_i32 = arith.constant 0 : i32
    %c0_i32_0 = arith.constant 0 : i32
    %c0_i32_1 = arith.constant 0 : i32
    return %c0_i32, %c0_i32_0 : i32, i32
  }
  func.func @transform_4(%arg0: i32) -> (i32, i32) {
    %c0_i32 = arith.constant 0 : i32
    %c0_i32_0 = arith.constant 0 : i32
    %c0_i32_1 = arith.constant 0 : i32
    return %c0_i32, %c0_i32_0 : i32, i32
  }
  func.func @transform_5(%arg0: i32) -> (i32, i32) {
    %c0_i32 = arith.constant 0 : i32
    %c0_i32_0 = arith.constant 0 : i32
    return %arg0, %c0_i32 : i32, i32
  }
}

module attributes {stable_mosaic.version = 11 : i64} {
  func.func @_ffnn_kernel_full(%arg0: i32, %arg1: memref<8x128xf32, #tpu.memory_space<vmem>>, %arg2: memref<128x128xf32, #tpu.memory_space<vmem>>, %arg3: memref<1x128xf32, #tpu.memory_space<vmem>>, %arg4: memref<128x128xf32, #tpu.memory_space<vmem>>, %arg5: memref<1x128xf32, #tpu.memory_space<vmem>>, %arg6: memref<8x128xf32, #tpu.memory_space<vmem>>) attributes {dimension_semantics = [#tpu.dimension_semantics<parallel>], iteration_bounds = array<i64: 1>, scalar_prefetch = 0 : i64, scratch_operands = 0 : i64, tpu.core_type = #tpu.core_type<tc>, window_params = [{transform_indices = @transform_0, window_bounds = array<i64: 8, 128>}, {pipeline_mode = #tpu.pipeline_mode<synchronous>, transform_indices = @transform_1, window_bounds = array<i64: 128, 128>}, {pipeline_mode = #tpu.pipeline_mode<synchronous>, transform_indices = @transform_2, window_bounds = array<i64: 1, 128>}, {pipeline_mode = #tpu.pipeline_mode<synchronous>, transform_indices = @transform_3, window_bounds = array<i64: 128, 128>}, {pipeline_mode = #tpu.pipeline_mode<synchronous>, transform_indices = @transform_4, window_bounds = array<i64: 1, 128>}, {transform_indices = @transform_5, window_bounds = array<i64: 8, 128>}]} {
    %c0 = arith.constant 0 : index
    %c0_0 = arith.constant 0 : index
    %0 = vector.load %arg1[%c0, %c0_0] : memref<8x128xf32, #tpu.memory_space<vmem>>, vector<8x128xf32>
    %c0_1 = arith.constant 0 : index
    %c0_2 = arith.constant 0 : index
    %1 = vector.load %arg2[%c0_1, %c0_2] : memref<128x128xf32, #tpu.memory_space<vmem>>, vector<128x128xf32>
    %cst = arith.constant dense<0.000000e+00> : vector<8x128xf32>
    %2 = tpu.matmul %0, %1, %cst {dimension_numbers = #tpu.dot_dimension_numbers<[1], [0], [0], [1], [0, 0, 1, 1], [], []>} : vector<8x128xf32>, vector<128x128xf32>, vector<8x128xf32> -> vector<8x128xf32>
    %c0_3 = arith.constant 0 : index
    %c0_4 = arith.constant 0 : index
    %3 = vector.load %arg3[%c0_3, %c0_4] : memref<1x128xf32, #tpu.memory_space<vmem>>, vector<1x128xf32>
    %4 = vector.broadcast %3 : vector<1x128xf32> to vector<8x128xf32>
    %5 = arith.addf %2, %4 : vector<8x128xf32>
    %cst_5 = arith.constant 0.000000e+00 : f32
    %6 = vector.broadcast %cst_5 : f32 to vector<8x128xf32>
    %7 = arith.maximumf %5, %6 : vector<8x128xf32>
    %c0_6 = arith.constant 0 : index
    %c0_7 = arith.constant 0 : index
    %8 = vector.load %arg4[%c0_6, %c0_7] : memref<128x128xf32, #tpu.memory_space<vmem>>, vector<128x128xf32>
    %cst_8 = arith.constant dense<0.000000e+00> : vector<8x128xf32>
    %9 = tpu.matmul %7, %8, %cst_8 {dimension_numbers = #tpu.dot_dimension_numbers<[1], [0], [0], [1], [0, 0, 1, 1], [], []>} : vector<8x128xf32>, vector<128x128xf32>, vector<8x128xf32> -> vector<8x128xf32>
    %c0_9 = arith.constant 0 : index
    %c0_10 = arith.constant 0 : index
    %10 = vector.load %arg5[%c0_9, %c0_10] : memref<1x128xf32, #tpu.memory_space<vmem>>, vector<1x128xf32>
    %11 = vector.broadcast %10 : vector<1x128xf32> to vector<8x128xf32>
    %12 = arith.addf %9, %11 : vector<8x128xf32>
    %c0_11 = arith.constant 0 : index
    %c0_12 = arith.constant 0 : index
    %13 = vector.load %arg6[%c0_11, %c0_12] : memref<8x128xf32, #tpu.memory_space<vmem>>, vector<8x128xf32>
    tpu.vector_store %arg6[%c0_11, %c0_12], %12 {strides = array<i32>} : memref<8x128xf32, #tpu.memory_space<vmem>>, vector<8x128xf32>,
    return
  }
  func.func @transform_0(%arg0: i32) -> (i32, i32) {
    %c0_i32 = arith.constant 0 : i32
    %c0_i32_0 = arith.constant 0 : i32
    return %arg0, %c0_i32 : i32, i32
  }
  func.func @transform_1(%arg0: i32) -> (i32, i32) {
    %c0_i32 = arith.constant 0 : i32
    %c0_i32_0 = arith.constant 0 : i32
    %c0_i32_1 = arith.constant 0 : i32
    return %c0_i32, %c0_i32_0 : i32, i32
  }
  func.func @transform_2(%arg0: i32) -> (i32, i32) {
    %c0_i32 = arith.constant 0 : i32
    %c0_i32_0 = arith.constant 0 : i32
    %c0_i32_1 = arith.constant 0 : i32
    return %c0_i32, %c0_i32_0 : i32, i32
  }
  func.func @transform_3(%arg0: i32) -> (i32, i32) {
    %c0_i32 = arith.constant 0 : i32
    %c0_i32_0 = arith.constant 0 : i32
    %c0_i32_1 = arith.constant 0 : i32
    return %c0_i32, %c0_i32_0 : i32, i32
  }
  func.func @transform_4(%arg0: i32) -> (i32, i32) {
    %c0_i32 = arith.constant 0 : i32
    %c0_i32_0 = arith.constant 0 : i32
    %c0_i32_1 = arith.constant 0 : i32
    return %c0_i32, %c0_i32_0 : i32, i32
  }
  func.func @transform_5(%arg0: i32) -> (i32, i32) {
    %c0_i32 = arith.constant 0 : i32
    %c0_i32_0 = arith.constant 0 : i32
    return %arg0, %c0_i32 : i32, i32
  }
}

</mosaic_0001>

<llo_original>
// kernel: ffnn_forward.1
$region0: #{ffnn_forward.1}
  #allocation0 [shape = 'u32[]', space=smem, size = 0x4, offset = 0x4, fixed_abs, tag = 'smem constant byte address 0x4 - core index']
  #allocation1 [shape = 'u32[144,128]{1,0:T(1,128)}', space=vmem, size = 0x12000, scoped, tag = 'internal scratch']
  %s0 = inlined_call_operand.vmem [shape: f32[8,128], index: 0, kind: input, shape index: {}]
  %s1 = inlined_call_operand.hbm [shape: f32[128,128], index: 1, kind: input, shape index: {}]
  %s2 = inlined_call_operand.vmem [shape: f32[1,128], index: 2, kind: input, shape index: {}]
  %s3 = inlined_call_operand.hbm [shape: f32[128,128], index: 3, kind: input, shape index: {}]
  %s4 = inlined_call_operand.vmem [shape: f32[1,128], index: 4, kind: input, shape index: {}]
  %s5 = inlined_call_operand.vmem [shape: f32[8,128], index: 5, kind: output, shape index: {}]
  %s6 = sld [smem:[#allocation0]]
  $region38: #{ffnn_forward.1} parent=0
    _
  %s8 = ssub.s32 1, %s6
  %s9 = scalar_select 0, %s8, %s6
  $region1: #{ffnn_forward.1} parent=0
    #allocation2 [shape = 'u8[65536]{0}', space=vmem, size = 0x10000, scoped, tag = 'input window, operand 1, single buffered']
    #allocation3 [shape = 's32[1]{0}', space=sflag, size = 0x4, scoped, tag = 'scoped memory for ffnn_forward.1']
    #allocation4 [shape = 'u8[65536]{0}', space=vmem, size = 0x10000, scoped, tag = 'input window, operand 3, single buffered']
    #allocation5 [shape = 's32[1]{0}', space=sflag, size = 0x4, scoped, tag = 'scoped memory for ffnn_forward.1']
    %10 = vsyncpa [#allocation3], 0
    %11 = vsyncpa [#allocation5], 0
    // Predicated region
    $region2: #{ffnn_forward.1} parent=1 // pred_check
      _
    $region3: #{ffnn_forward.1} parent=1 // pred_check_branch
      %13 = sbr.rel (0) target = $region5
    $region4: #{ffnn_forward.1} parent=1 // pred_region
      _
    $region5: #{ffnn_forward.1} parent=1 // pred_fallthru
      _
    // Predicated region
    $region6: #{ffnn_forward.1} parent=1 // pred_check
      _
    $region7: #{ffnn_forward.1} parent=1 // pred_check_branch
      %15 = sbr.rel (0) target = $region9
    $region8: #{ffnn_forward.1} parent=1 // pred_region
      %s17 = ssub.s32 2048, 2048
      %18 = vsyncadd [#allocation3], %s17
      %s19 = sshll.u32 [#allocation2], 4
      %s20 = int_to_ptr.vmem [resolvable:$true] %s19
      %25 = dma.hbm_to_vmem [thread:$0]  %s1, 2048, %s20, [#allocation3], 128, 128, 8
    $region9: #{ffnn_forward.1} parent=1 // pred_fallthru
      _
    // Predicated region
    $region10: #{ffnn_forward.1} parent=1 // pred_check
      _
    $region11: #{ffnn_forward.1} parent=1 // pred_check_branch
      %27 = sbr.rel (0) target = $region13
    $region12: #{ffnn_forward.1} parent=1 // pred_region
      _
    $region13: #{ffnn_forward.1} parent=1 // pred_fallthru
      _
    // Predicated region
    $region14: #{ffnn_forward.1} parent=1 // pred_check
      _
    $region15: #{ffnn_forward.1} parent=1 // pred_check_branch
      %29 = sbr.rel (0) target = $region17
    $region16: #{ffnn_forward.1} parent=1 // pred_region
      %s31 = ssub.s32 2048, 2048
      %32 = vsyncadd [#allocation5], %s31
      %s33 = sshll.u32 [#allocation4], 4
      %s34 = int_to_ptr.vmem [resolvable:$true] %s33
      %39 = dma.hbm_to_vmem [thread:$0]  %s3, 2048, %s34, [#allocation5], 128, 128, 8
    $region17: #{ffnn_forward.1} parent=1 // pred_fallthru
      _
    // Predicated region
    $region18: #{ffnn_forward.1} parent=1 // pred_check
      _
    $region19: #{ffnn_forward.1} parent=1 // pred_check_branch
      %41 = sbr.rel (0) target = $region21
    $region20: #{ffnn_forward.1} parent=1 // pred_region
      _
    $region21: #{ffnn_forward.1} parent=1 // pred_fallthru
      _
    // Predicated region
    $region22: #{ffnn_forward.1} parent=1 // pred_check
      _
    $region23: #{ffnn_forward.1} parent=1 // pred_check_branch
      %43 = sbr.rel (0) target = $region25
    $region24: #{ffnn_forward.1} parent=1 // pred_region
      %44 = dma.done [#allocation3], 2048
    $region25: #{ffnn_forward.1} parent=1 // pred_fallthru
      _
    // Predicated region
    $region26: #{ffnn_forward.1} parent=1 // pred_check
      _
    $region27: #{ffnn_forward.1} parent=1 // pred_check_branch
      %46 = sbr.rel (0) target = $region29
    $region28: #{ffnn_forward.1} parent=1 // pred_region
      %47 = dma.done [#allocation5], 2048
    $region29: #{ffnn_forward.1} parent=1 // pred_fallthru
      _
    %v48 = vld [vmem:[%s0] sm:$0xff]
    %v49 = vld [vmem:[#allocation2] sm:$0xff]
    %v50 = vld [vmem:[#allocation2 + $0x8] sm:$0xff]
    %v51 = vld [vmem:[#allocation2 + $0x10] sm:$0xff]
    %v52 = vld [vmem:[#allocation2 + $0x18] sm:$0xff]
    %v53 = vld [vmem:[#allocation2 + $0x20] sm:$0xff]
    %v54 = vld [vmem:[#allocation2 + $0x28] sm:$0xff]
    %v55 = vld [vmem:[#allocation2 + $0x30] sm:$0xff]
    %v56 = vld [vmem:[#allocation2 + $0x38] sm:$0xff]
    %v57 = vld [vmem:[#allocation2 + $0x40] sm:$0xff]
    %v58 = vld [vmem:[#allocation2 + $0x48] sm:$0xff]
    %v59 = vld [vmem:[#allocation2 + $0x50] sm:$0xff]
    %v60 = vld [vmem:[#allocation2 + $0x58] sm:$0xff]
    %v61 = vld [vmem:[#allocation2 + $0x60] sm:$0xff]
    %v62 = vld [vmem:[#allocation2 + $0x68] sm:$0xff]
    %v63 = vld [vmem:[#allocation2 + $0x70] sm:$0xff]
    %v64 = vld [vmem:[#allocation2 + $0x78] sm:$0xff]
    %v65 = vld [vmem:[%s2] sm:$0x1]
    %v67 = vlaneseq
    %v68 = vshrl.u32 %v67, 7
    %v69 = vsub.s32 0, %v68
    %v70 = vrot.slane %v65, %v69
    %72 = vmatprep.subr.mxu0 0.0
    %73 = vmatpush1.msra.mxu0 %v64
    %74 = vmatprep.subr.mxu0 0.0
    %75 = vmatpush1.msra.mxu0 %v63
    %76 = vmatprep.subr.mxu0 0.0
    %77 = vmatpush1.msra.mxu0 %v62
    %78 = vmatprep.subr.mxu0 0.0
    %79 = vmatpush1.msra.mxu0 %v61
    %80 = vmatprep.subr.mxu0 0.0
    %81 = vmatpush1.msra.mxu0 %v60
    %82 = vmatprep.subr.mxu0 0.0
    %83 = vmatpush1.msra.mxu0 %v59
    %84 = vmatprep.subr.mxu0 0.0
    %85 = vmatpush1.msra.mxu0 %v58
    %86 = vmatprep.subr.mxu0 0.0
    %87 = vmatpush1.msra.mxu0 %v57
    %88 = vmatprep.subr.mxu0 0.0
    %89 = vmatpush1.msra.mxu0 %v56
    %90 = vmatprep.subr.mxu0 0.0
    %91 = vmatpush1.msra.mxu0 %v55
    %92 = vmatprep.subr.mxu0 0.0
    %93 = vmatpush1.msra.mxu0 %v54
    %94 = vmatprep.subr.mxu0 0.0
    %95 = vmatpush1.msra.mxu0 %v53
    %96 = vmatprep.subr.mxu0 0.0
    %97 = vmatpush1.msra.mxu0 %v52
    %98 = vmatprep.subr.mxu0 0.0
    %99 = vmatpush1.msra.mxu0 %v51
    %100 = vmatprep.subr.mxu0 0.0
    %101 = vmatpush1.msra.mxu0 %v50
    %102 = vmatprep.subr.mxu0 0.0
    %103 = vmatpush1.msra.mxu0 %v49
    %104 = vmatprep.subr.mxu0 0.0
    %105 = vmatpush2.msra.mxu0 0.0
    %106 = vmatprep.subr.mxu0 0.0
    %107 = vmatpush2.msra.mxu0 0.0
    %108 = vmatprep.subr.mxu0 0.0
    %109 = vmatpush2.msra.mxu0 0.0
    %110 = vmatprep.subr.mxu0 0.0
    %111 = vmatpush2.msra.mxu0 0.0
    %112 = vmatprep.subr.mxu0 0.0
    %113 = vmatpush2.msra.mxu0 0.0
    %114 = vmatprep.subr.mxu0 0.0
    %115 = vmatpush2.msra.mxu0 0.0
    %116 = vmatprep.subr.mxu0 0.0
    %117 = vmatpush2.msra.mxu0 0.0
    %118 = vmatprep.subr.mxu0 0.0
    %119 = vmatpush2.msra.mxu0 0.0
    %120 = vmatprep.subr.mxu0 0.0
    %121 = vmatpush2.msra.mxu0 0.0
    %122 = vmatprep.subr.mxu0 0.0
    %123 = vmatpush2.msra.mxu0 0.0
    %124 = vmatprep.subr.mxu0 0.0
    %125 = vmatpush2.msra.mxu0 0.0
    %126 = vmatprep.subr.mxu0 0.0
    %127 = vmatpush2.msra.mxu0 0.0
    %128 = vmatprep.subr.mxu0 0.0
    %129 = vmatpush2.msra.mxu0 0.0
    %130 = vmatprep.subr.mxu0 0.0
    %131 = vmatpush2.msra.mxu0 0.0
    %132 = vmatprep.subr.mxu0 0.0
    %133 = vmatpush2.msra.mxu0 0.0
    %134 = vmatprep.subr.mxu0 0.0
    %135 = vmatpush2.msra.mxu0 0.0
    %136 = vmatprep.mubr.f32.mxu0 0.0
    %137 = vmatmul.mubr.f32.gmra.mxu0 %v48
    %v138 = vpop.f32.mrf.mxu0
    %v139 = vadd.f32 %v70, %v138
    %v140 = vpop.f32.mrf.mxu0
    %141 = vdwg.mxu0
    %v142 = vmax.f32 %v139, 0.0
    %v143 = vld [vmem:[#allocation4] sm:$0xff]
    %v144 = vld [vmem:[#allocation4 + $0x8] sm:$0xff]
    %v145 = vld [vmem:[#allocation4 + $0x10] sm:$0xff]
    %v146 = vld [vmem:[#allocation4 + $0x18] sm:$0xff]
    %v147 = vld [vmem:[#allocation4 + $0x20] sm:$0xff]
    %v148 = vld [vmem:[#allocation4 + $0x28] sm:$0xff]
    %v149 = vld [vmem:[#allocation4 + $0x30] sm:$0xff]
    %v150 = vld [vmem:[#allocation4 + $0x38] sm:$0xff]
    %v151 = vld [vmem:[#allocation4 + $0x40] sm:$0xff]
    %v152 = vld [vmem:[#allocation4 + $0x48] sm:$0xff]
    %v153 = vld [vmem:[#allocation4 + $0x50] sm:$0xff]
    %v154 = vld [vmem:[#allocation4 + $0x58] sm:$0xff]
    %v155 = vld [vmem:[#allocation4 + $0x60] sm:$0xff]
    %v156 = vld [vmem:[#allocation4 + $0x68] sm:$0xff]
    %v157 = vld [vmem:[#allocation4 + $0x70] sm:$0xff]
    %v158 = vld [vmem:[#allocation4 + $0x78] sm:$0xff]
    %v159 = vld [vmem:[%s4] sm:$0x1]
    %v161 = vlaneseq
    %v162 = vshrl.u32 %v161, 7
    %v163 = vsub.s32 0, %v162
    %v164 = vrot.slane %v159, %v163
    %166 = vmatprep.subr.mxu0 0.0
    %167 = vmatpush1.msra.mxu0 %v158
    %168 = vmatprep.subr.mxu0 0.0
    %169 = vmatpush1.msra.mxu0 %v157
    %170 = vmatprep.subr.mxu0 0.0
    %171 = vmatpush1.msra.mxu0 %v156
    %172 = vmatprep.subr.mxu0 0.0
    %173 = vmatpush1.msra.mxu0 %v155
    %174 = vmatprep.subr.mxu0 0.0
    %175 = vmatpush1.msra.mxu0 %v154
    %176 = vmatprep.subr.mxu0 0.0
    %177 = vmatpush1.msra.mxu0 %v153
    %178 = vmatprep.subr.mxu0 0.0
    %179 = vmatpush1.msra.mxu0 %v152
    %180 = vmatprep.subr.mxu0 0.0
    %181 = vmatpush1.msra.mxu0 %v151
    %182 = vmatprep.subr.mxu0 0.0
    %183 = vmatpush1.msra.mxu0 %v150
    %184 = vmatprep.subr.mxu0 0.0
    %185 = vmatpush1.msra.mxu0 %v149
    %186 = vmatprep.subr.mxu0 0.0
    %187 = vmatpush1.msra.mxu0 %v148
    %188 = vmatprep.subr.mxu0 0.0
    %189 = vmatpush1.msra.mxu0 %v147
    %190 = vmatprep.subr.mxu0 0.0
    %191 = vmatpush1.msra.mxu0 %v146
    %192 = vmatprep.subr.mxu0 0.0
    %193 = vmatpush1.msra.mxu0 %v145
    %194 = vmatprep.subr.mxu0 0.0
    %195 = vmatpush1.msra.mxu0 %v144
    %196 = vmatprep.subr.mxu0 0.0
    %197 = vmatpush1.msra.mxu0 %v143
    %198 = vmatprep.subr.mxu0 0.0
    %199 = vmatpush2.msra.mxu0 0.0
    %200 = vmatprep.subr.mxu0 0.0
    %201 = vmatpush2.msra.mxu0 0.0
    %202 = vmatprep.subr.mxu0 0.0
    %203 = vmatpush2.msra.mxu0 0.0
    %204 = vmatprep.subr.mxu0 0.0
    %205 = vmatpush2.msra.mxu0 0.0
    %206 = vmatprep.subr.mxu0 0.0
    %207 = vmatpush2.msra.mxu0 0.0
    %208 = vmatprep.subr.mxu0 0.0
    %209 = vmatpush2.msra.mxu0 0.0
    %210 = vmatprep.subr.mxu0 0.0
    %211 = vmatpush2.msra.mxu0 0.0
    %212 = vmatprep.subr.mxu0 0.0
    %213 = vmatpush2.msra.mxu0 0.0
    %214 = vmatprep.subr.mxu0 0.0
    %215 = vmatpush2.msra.mxu0 0.0
    %216 = vmatprep.subr.mxu0 0.0
    %217 = vmatpush2.msra.mxu0 0.0
    %218 = vmatprep.subr.mxu0 0.0
    %219 = vmatpush2.msra.mxu0 0.0
    %220 = vmatprep.subr.mxu0 0.0
    %221 = vmatpush2.msra.mxu0 0.0
    %222 = vmatprep.subr.mxu0 0.0
    %223 = vmatpush2.msra.mxu0 0.0
    %224 = vmatprep.subr.mxu0 0.0
    %225 = vmatpush2.msra.mxu0 0.0
    %226 = vmatprep.subr.mxu0 0.0
    %227 = vmatpush2.msra.mxu0 0.0
    %228 = vmatprep.subr.mxu0 0.0
    %229 = vmatpush2.msra.mxu0 0.0
    %230 = vmatprep.mubr.f32.mxu0 0.0
    %231 = vmatmul.mubr.f32.gmra.mxu0 %v142
    %v232 = vpop.f32.mrf.mxu0
    %v233 = vadd.f32 %v164, %v232
    %v234 = vpop.f32.mrf.mxu0
    %235 = vdwg.mxu0
    %236 = vst [vmem:[%s5] sm:$0xff] %v233
    // Predicated region
    $region30: #{ffnn_forward.1} parent=1 // pred_check
      _
    $region31: #{ffnn_forward.1} parent=1 // pred_check_branch
      %238 = sbr.rel (0) target = $region33
    $region32: #{ffnn_forward.1} parent=1 // pred_region
      _
    $region33: #{ffnn_forward.1} parent=1 // pred_fallthru
      _
    // Predicated region
    $region34: #{ffnn_forward.1} parent=1 // pred_check
      _
    $region35: #{ffnn_forward.1} parent=1 // pred_check_branch
      %240 = sbr.rel (0) target = $region37
    $region36: #{ffnn_forward.1} parent=1 // pred_region
      _
    $region37: #{ffnn_forward.1} parent=1 // pred_fallthru
      _
    %241 = vsyncpa [#allocation3], 1
    %242 = vsyncpa [#allocation5], 1

// kernel: ffnn_forward.1
$region0: #{ffnn_forward.1}
  #allocation0 [shape = 'u32[]', space=smem, size = 0x4, offset = 0x4, fixed_abs, tag = 'smem constant byte address 0x4 - core index']
  #allocation1 [shape = 'u32[144,128]{1,0:T(1,128)}', space=vmem, size = 0x12000, scoped, tag = 'internal scratch']
  %s0 = inlined_call_operand.vmem [shape: f32[8,128], index: 0, kind: input, shape index: {}]
  %s1 = inlined_call_operand.hbm [shape: f32[128,128], index: 1, kind: input, shape index: {}]
  %s2 = inlined_call_operand.vmem [shape: f32[1,128], index: 2, kind: input, shape index: {}]
  %s3 = inlined_call_operand.hbm [shape: f32[128,128], index: 3, kind: input, shape index: {}]
  %s4 = inlined_call_operand.vmem [shape: f32[1,128], index: 4, kind: input, shape index: {}]
  %s5 = inlined_call_operand.vmem [shape: f32[8,128], index: 5, kind: output, shape index: {}]
  %s6 = sld [smem:[#allocation0]]
  $region38: #{ffnn_forward.1} parent=0
    _
  %s8 = ssub.s32 1, %s6
  %s9 = scalar_select 0, %s8, %s6
  $region1: #{ffnn_forward.1} parent=0
    #allocation2 [shape = 'u8[65536]{0}', space=vmem, size = 0x10000, scoped, tag = 'input window, operand 1, single buffered']
    #allocation3 [shape = 's32[1]{0}', space=sflag, size = 0x4, scoped, tag = 'scoped memory for ffnn_forward.1']
    #allocation4 [shape = 'u8[65536]{0}', space=vmem, size = 0x10000, scoped, tag = 'input window, operand 3, single buffered']
    #allocation5 [shape = 's32[1]{0}', space=sflag, size = 0x4, scoped, tag = 'scoped memory for ffnn_forward.1']
    %10 = vsyncpa [#allocation3], 0
    %11 = vsyncpa [#allocation5], 0
    // Predicated region
    $region2: #{ffnn_forward.1} parent=1 // pred_check
      _
    $region3: #{ffnn_forward.1} parent=1 // pred_check_branch
      %13 = sbr.rel (0) target = $region5
    $region4: #{ffnn_forward.1} parent=1 // pred_region
      _
    $region5: #{ffnn_forward.1} parent=1 // pred_fallthru
      _
    // Predicated region
    $region6: #{ffnn_forward.1} parent=1 // pred_check
      _
    $region7: #{ffnn_forward.1} parent=1 // pred_check_branch
      %15 = sbr.rel (0) target = $region9
    $region8: #{ffnn_forward.1} parent=1 // pred_region
      %s17 = ssub.s32 2048, 2048
      %18 = vsyncadd [#allocation3], %s17
      %s19 = sshll.u32 [#allocation2], 4
      %s20 = int_to_ptr.vmem [resolvable:$true] %s19
      %25 = dma.hbm_to_vmem [thread:$0]  %s1, 2048, %s20, [#allocation3], 128, 128, 8
    $region9: #{ffnn_forward.1} parent=1 // pred_fallthru
      _
    // Predicated region
    $region10: #{ffnn_forward.1} parent=1 // pred_check
      _
    $region11: #{ffnn_forward.1} parent=1 // pred_check_branch
      %27 = sbr.rel (0) target = $region13
    $region12: #{ffnn_forward.1} parent=1 // pred_region
      _
    $region13: #{ffnn_forward.1} parent=1 // pred_fallthru
      _
    // Predicated region
    $region14: #{ffnn_forward.1} parent=1 // pred_check
      _
    $region15: #{ffnn_forward.1} parent=1 // pred_check_branch
      %29 = sbr.rel (0) target = $region17
    $region16: #{ffnn_forward.1} parent=1 // pred_region
      %s31 = ssub.s32 2048, 2048
      %32 = vsyncadd [#allocation5], %s31
      %s33 = sshll.u32 [#allocation4], 4
      %s34 = int_to_ptr.vmem [resolvable:$true] %s33
      %39 = dma.hbm_to_vmem [thread:$0]  %s3, 2048, %s34, [#allocation5], 128, 128, 8
    $region17: #{ffnn_forward.1} parent=1 // pred_fallthru
      _
    // Predicated region
    $region18: #{ffnn_forward.1} parent=1 // pred_check
      _
    $region19: #{ffnn_forward.1} parent=1 // pred_check_branch
      %41 = sbr.rel (0) target = $region21
    $region20: #{ffnn_forward.1} parent=1 // pred_region
      _
    $region21: #{ffnn_forward.1} parent=1 // pred_fallthru
      _
    // Predicated region
    $region22: #{ffnn_forward.1} parent=1 // pred_check
      _
    $region23: #{ffnn_forward.1} parent=1 // pred_check_branch
      %43 = sbr.rel (0) target = $region25
    $region24: #{ffnn_forward.1} parent=1 // pred_region
      %44 = dma.done [#allocation3], 2048
    $region25: #{ffnn_forward.1} parent=1 // pred_fallthru
      _
    // Predicated region
    $region26: #{ffnn_forward.1} parent=1 // pred_check
      _
    $region27: #{ffnn_forward.1} parent=1 // pred_check_branch
      %46 = sbr.rel (0) target = $region29
    $region28: #{ffnn_forward.1} parent=1 // pred_region
      %47 = dma.done [#allocation5], 2048
    $region29: #{ffnn_forward.1} parent=1 // pred_fallthru
      _
    %v48 = vld [vmem:[%s0] sm:$0xff]
    %v49 = vld [vmem:[#allocation2] sm:$0xff]
    %v50 = vld [vmem:[#allocation2 + $0x8] sm:$0xff]
    %v51 = vld [vmem:[#allocation2 + $0x10] sm:$0xff]
    %v52 = vld [vmem:[#allocation2 + $0x18] sm:$0xff]
    %v53 = vld [vmem:[#allocation2 + $0x20] sm:$0xff]
    %v54 = vld [vmem:[#allocation2 + $0x28] sm:$0xff]
    %v55 = vld [vmem:[#allocation2 + $0x30] sm:$0xff]
    %v56 = vld [vmem:[#allocation2 + $0x38] sm:$0xff]
    %v57 = vld [vmem:[#allocation2 + $0x40] sm:$0xff]
    %v58 = vld [vmem:[#allocation2 + $0x48] sm:$0xff]
    %v59 = vld [vmem:[#allocation2 + $0x50] sm:$0xff]
    %v60 = vld [vmem:[#allocation2 + $0x58] sm:$0xff]
    %v61 = vld [vmem:[#allocation2 + $0x60] sm:$0xff]
    %v62 = vld [vmem:[#allocation2 + $0x68] sm:$0xff]
    %v63 = vld [vmem:[#allocation2 + $0x70] sm:$0xff]
    %v64 = vld [vmem:[#allocation2 + $0x78] sm:$0xff]
    %v65 = vld [vmem:[%s2] sm:$0x1]
    %v67 = vlaneseq
    %v68 = vshrl.u32 %v67, 7
    %v69 = vsub.s32 0, %v68
    %v70 = vrot.slane %v65, %v69
    %72 = vmatprep.subr.mxu0 0.0
    %73 = vmatpush1.msra.mxu0 %v64
    %74 = vmatprep.subr.mxu0 0.0
    %75 = vmatpush1.msra.mxu0 %v63
    %76 = vmatprep.subr.mxu0 0.0
    %77 = vmatpush1.msra.mxu0 %v62
    %78 = vmatprep.subr.mxu0 0.0
    %79 = vmatpush1.msra.mxu0 %v61
    %80 = vmatprep.subr.mxu0 0.0
    %81 = vmatpush1.msra.mxu0 %v60
    %82 = vmatprep.subr.mxu0 0.0
    %83 = vmatpush1.msra.mxu0 %v59
    %84 = vmatprep.subr.mxu0 0.0
    %85 = vmatpush1.msra.mxu0 %v58
    %86 = vmatprep.subr.mxu0 0.0
    %87 = vmatpush1.msra.mxu0 %v57
    %88 = vmatprep.subr.mxu0 0.0
    %89 = vmatpush1.msra.mxu0 %v56
    %90 = vmatprep.subr.mxu0 0.0
    %91 = vmatpush1.msra.mxu0 %v55
    %92 = vmatprep.subr.mxu0 0.0
    %93 = vmatpush1.msra.mxu0 %v54
    %94 = vmatprep.subr.mxu0 0.0
    %95 = vmatpush1.msra.mxu0 %v53
    %96 = vmatprep.subr.mxu0 0.0
    %97 = vmatpush1.msra.mxu0 %v52
    %98 = vmatprep.subr.mxu0 0.0
    %99 = vmatpush1.msra.mxu0 %v51
    %100 = vmatprep.subr.mxu0 0.0
    %101 = vmatpush1.msra.mxu0 %v50
    %102 = vmatprep.subr.mxu0 0.0
    %103 = vmatpush1.msra.mxu0 %v49
    %104 = vmatprep.subr.mxu0 0.0
    %105 = vmatpush2.msra.mxu0 0.0
    %106 = vmatprep.subr.mxu0 0.0
    %107 = vmatpush2.msra.mxu0 0.0
    %108 = vmatprep.subr.mxu0 0.0
    %109 = vmatpush2.msra.mxu0 0.0
    %110 = vmatprep.subr.mxu0 0.0
    %111 = vmatpush2.msra.mxu0 0.0
    %112 = vmatprep.subr.mxu0 0.0
    %113 = vmatpush2.msra.mxu0 0.0
    %114 = vmatprep.subr.mxu0 0.0
    %115 = vmatpush2.msra.mxu0 0.0
    %116 = vmatprep.subr.mxu0 0.0
    %117 = vmatpush2.msra.mxu0 0.0
    %118 = vmatprep.subr.mxu0 0.0
    %119 = vmatpush2.msra.mxu0 0.0
    %120 = vmatprep.subr.mxu0 0.0
    %121 = vmatpush2.msra.mxu0 0.0
    %122 = vmatprep.subr.mxu0 0.0
    %123 = vmatpush2.msra.mxu0 0.0
    %124 = vmatprep.subr.mxu0 0.0
    %125 = vmatpush2.msra.mxu0 0.0
    %126 = vmatprep.subr.mxu0 0.0
    %127 = vmatpush2.msra.mxu0 0.0
    %128 = vmatprep.subr.mxu0 0.0
    %129 = vmatpush2.msra.mxu0 0.0
    %130 = vmatprep.subr.mxu0 0.0
    %131 = vmatpush2.msra.mxu0 0.0
    %132 = vmatprep.subr.mxu0 0.0
    %133 = vmatpush2.msra.mxu0 0.0
    %134 = vmatprep.subr.mxu0 0.0
    %135 = vmatpush2.msra.mxu0 0.0
    %136 = vmatprep.mubr.f32.mxu0 0.0
    %137 = vmatmul.mubr.f32.gmra.mxu0 %v48
    %v138 = vpop.f32.mrf.mxu0
    %v139 = vadd.f32 %v70, %v138
    %v140 = vpop.f32.mrf.mxu0
    %141 = vdwg.mxu0
    %v142 = vmax.f32 %v139, 0.0
    %v143 = vld [vmem:[#allocation4] sm:$0xff]
    %v144 = vld [vmem:[#allocation4 + $0x8] sm:$0xff]
    %v145 = vld [vmem:[#allocation4 + $0x10] sm:$0xff]
    %v146 = vld [vmem:[#allocation4 + $0x18] sm:$0xff]
    %v147 = vld [vmem:[#allocation4 + $0x20] sm:$0xff]
    %v148 = vld [vmem:[#allocation4 + $0x28] sm:$0xff]
    %v149 = vld [vmem:[#allocation4 + $0x30] sm:$0xff]
    %v150 = vld [vmem:[#allocation4 + $0x38] sm:$0xff]
    %v151 = vld [vmem:[#allocation4 + $0x40] sm:$0xff]
    %v152 = vld [vmem:[#allocation4 + $0x48] sm:$0xff]
    %v153 = vld [vmem:[#allocation4 + $0x50] sm:$0xff]
    %v154 = vld [vmem:[#allocation4 + $0x58] sm:$0xff]
    %v155 = vld [vmem:[#allocation4 + $0x60] sm:$0xff]
    %v156 = vld [vmem:[#allocation4 + $0x68] sm:$0xff]
    %v157 = vld [vmem:[#allocation4 + $0x70] sm:$0xff]
    %v158 = vld [vmem:[#allocation4 + $0x78] sm:$0xff]
    %v159 = vld [vmem:[%s4] sm:$0x1]
    %v161 = vlaneseq
    %v162 = vshrl.u32 %v161, 7
    %v163 = vsub.s32 0, %v162
    %v164 = vrot.slane %v159, %v163
    %166 = vmatprep.subr.mxu0 0.0
    %167 = vmatpush1.msra.mxu0 %v158
    %168 = vmatprep.subr.mxu0 0.0
    %169 = vmatpush1.msra.mxu0 %v157
    %170 = vmatprep.subr.mxu0 0.0
    %171 = vmatpush1.msra.mxu0 %v156
    %172 = vmatprep.subr.mxu0 0.0
    %173 = vmatpush1.msra.mxu0 %v155
    %174 = vmatprep.subr.mxu0 0.0
    %175 = vmatpush1.msra.mxu0 %v154
    %176 = vmatprep.subr.mxu0 0.0
    %177 = vmatpush1.msra.mxu0 %v153
    %178 = vmatprep.subr.mxu0 0.0
    %179 = vmatpush1.msra.mxu0 %v152
    %180 = vmatprep.subr.mxu0 0.0
    %181 = vmatpush1.msra.mxu0 %v151
    %182 = vmatprep.subr.mxu0 0.0
    %183 = vmatpush1.msra.mxu0 %v150
    %184 = vmatprep.subr.mxu0 0.0
    %185 = vmatpush1.msra.mxu0 %v149
    %186 = vmatprep.subr.mxu0 0.0
    %187 = vmatpush1.msra.mxu0 %v148
    %188 = vmatprep.subr.mxu0 0.0
    %189 = vmatpush1.msra.mxu0 %v147
    %190 = vmatprep.subr.mxu0 0.0
    %191 = vmatpush1.msra.mxu0 %v146
    %192 = vmatprep.subr.mxu0 0.0
    %193 = vmatpush1.msra.mxu0 %v145
    %194 = vmatprep.subr.mxu0 0.0
    %195 = vmatpush1.msra.mxu0 %v144
    %196 = vmatprep.subr.mxu0 0.0
    %197 = vmatpush1.msra.mxu0 %v143
    %198 = vmatprep.subr.mxu0 0.0
    %199 = vmatpush2.msra.mxu0 0.0
    %200 = vmatprep.subr.mxu0 0.0
    %201 = vmatpush2.msra.mxu0 0.0
    %202 = vmatprep.subr.mxu0 0.0
    %203 = vmatpush2.msra.mxu0 0.0
    %204 = vmatprep.subr.mxu0 0.0
    %205 = vmatpush2.msra.mxu0 0.0
    %206 = vmatprep.subr.mxu0 0.0
    %207 = vmatpush2.msra.mxu0 0.0
    %208 = vmatprep.subr.mxu0 0.0
    %209 = vmatpush2.msra.mxu0 0.0
    %210 = vmatprep.subr.mxu0 0.0
    %211 = vmatpush2.msra.mxu0 0.0
    %212 = vmatprep.subr.mxu0 0.0
    %213 = vmatpush2.msra.mxu0 0.0
    %214 = vmatprep.subr.mxu0 0.0
    %215 = vmatpush2.msra.mxu0 0.0
    %216 = vmatprep.subr.mxu0 0.0
    %217 = vmatpush2.msra.mxu0 0.0
    %218 = vmatprep.subr.mxu0 0.0
    %219 = vmatpush2.msra.mxu0 0.0
    %220 = vmatprep.subr.mxu0 0.0
    %221 = vmatpush2.msra.mxu0 0.0
    %222 = vmatprep.subr.mxu0 0.0
    %223 = vmatpush2.msra.mxu0 0.0
    %224 = vmatprep.subr.mxu0 0.0
    %225 = vmatpush2.msra.mxu0 0.0
    %226 = vmatprep.subr.mxu0 0.0
    %227 = vmatpush2.msra.mxu0 0.0
    %228 = vmatprep.subr.mxu0 0.0
    %229 = vmatpush2.msra.mxu0 0.0
    %230 = vmatprep.mubr.f32.mxu0 0.0
    %231 = vmatmul.mubr.f32.gmra.mxu0 %v142
    %v232 = vpop.f32.mrf.mxu0
    %v233 = vadd.f32 %v164, %v232
    %v234 = vpop.f32.mrf.mxu0
    %235 = vdwg.mxu0
    %236 = vst [vmem:[%s5] sm:$0xff] %v233
    // Predicated region
    $region30: #{ffnn_forward.1} parent=1 // pred_check
      _
    $region31: #{ffnn_forward.1} parent=1 // pred_check_branch
      %238 = sbr.rel (0) target = $region33
    $region32: #{ffnn_forward.1} parent=1 // pred_region
      _
    $region33: #{ffnn_forward.1} parent=1 // pred_fallthru
      _
    // Predicated region
    $region34: #{ffnn_forward.1} parent=1 // pred_check
      _
    $region35: #{ffnn_forward.1} parent=1 // pred_check_branch
      %240 = sbr.rel (0) target = $region37
    $region36: #{ffnn_forward.1} parent=1 // pred_region
      _
    $region37: #{ffnn_forward.1} parent=1 // pred_fallthru
      _
    %241 = vsyncpa [#allocation3], 1
    %242 = vsyncpa [#allocation5], 1

</llo_original>
